<compile_context>
chip_gen: v7x
topology: tpu7x:2x2x1
jax: 0.10.0
libtpu: 0.0.40
codegen_flags: <defaults>
</compile_context>

<pallas_src>
import jax
import jax.numpy as jnp
from jax.experimental import pallas as pl
from jax.experimental.pallas import tpu as pltpu

_LANE = 128      # vreg lane width
_SUBLANE = 8     # f32 sublane count


def _round_up(x, m):
    return -(-x // m) * m


def _tpu_device_kind():
    if jax.default_backend() != "tpu":
        return ""
    try:
        return jax.devices()[0].device_kind.lower()
    except Exception:
        return "tpu"


def _make_fused_kernel(bs, compute_dtype):
    """TPU path: standard-normal draw fused in-kernel (no noise HBM stream)."""

    def kernel(seed_ref, sigma_ref, x_ref, o_ref):
        bi = pl.program_id(0)   # sample-block index
        ri = pl.program_id(1)   # row-chunk index inside the sample block
        # Independent, deterministic stream per (seed, device, sample-block, chunk).
        # TODO(synk): torch.randn's RNG stream cannot be bit-matched; this reproduces
        #             the N(0,1)*sigma distribution only.
        pltpu.prng_seed(seed_ref[0], seed_ref[1], bi, ri)
        noise = pltpu.stateful_normal(x_ref.shape, compute_dtype)
        for j in range(bs):                       # bs is static -> unrolled
            s = sigma_ref[bi * bs + j].astype(compute_dtype)   # f32 scalar from SMEM
            xj = x_ref[j].astype(compute_dtype)
            o_ref[j] = (xj + noise[j] * s).astype(o_ref.dtype)

    return kernel


def _make_addnoise_kernel(bs):
    """Fallback path (interpret / non-TPU): noise is a streamed input."""

    def kernel(sigma_ref, x_ref, noise_ref, o_ref):
        bi = pl.program_id(0)
        for j in range(bs):
            s = sigma_ref[bi * bs + j]
            xj = x_ref[j].astype(jnp.float32)
            nj = noise_ref[j].astype(jnp.float32)
            o_ref[j] = (xj + nj * s).astype(o_ref.dtype)

    return kernel


def parallel_gaussian_noise(x, sigma, seed=0, device_index=0, *,
                            donate_x=False, compute_dtype=None,
                            target_block_bytes=None):
    """out = x + randn_like(x) * sigma[device_index*B : (device_index+1)*B]."""
    orig_shape = x.shape
    B = orig_shape[0]
    n_elems = 1
    for d in orig_shape[1:]:
        n_elems *= int(d)

    on_tpu = jax.default_backend() == "tpu"
    kind = _tpu_device_kind()
    is_v5e = ("v5 lite" in kind) or ("v5e" in kind) or ("v5lite" in kind)

    if compute_dtype is None:
        # bf16 compute only where EUP/VALU are bf16-capable (v6e/v7x) and x is bf16.
        if on_tpu and not is_v5e and x.dtype == jnp.bfloat16:
            compute_dtype = jnp.bfloat16
        else:
            compute_dtype = jnp.float32
    if target_block_bytes is None:
        target_block_bytes = (2 << 20) if is_v5e else (4 << 20)

    # Per-device sigma slice, kept in f32 for exact SMEM scalars (never quantized).
    sigma_flat = sigma.reshape(-1).astype(jnp.float32)
    sigma_shard = sigma_flat[device_index * B:(device_index + 1) * B]

    # Lane-dense layout: (B, rows, 128). Pad only to a lane multiple (rare).
    rows = -(-n_elems // _LANE)
    lane_pad = rows * _LANE - n_elems
    x_flat = x.reshape(B, n_elems)
    if lane_pad:
        x_flat = jnp.pad(x_flat, ((0, 0), (0, lane_pad)))
    x3 = x_flat.reshape(B, rows, _LANE)

    # Block sizing: ~target_block_bytes per operand, (8,128)-aligned.
    itemsize = jnp.dtype(x.dtype).itemsize
    target_rows = max(_SUBLANE, (target_block_bytes // (_LANE * itemsize)) // _SUBLANE * _SUBLANE)
    tr = min(target_rows, _round_up(rows, _SUBLANE))            # multiple of 8
    slab_bytes = tr * _LANE * itemsize
    bs = max(1, min(B, target_block_bytes // slab_bytes, 256))  # samples per block
    while B % bs:                                               # keep B exactly covered
        bs -= 1
    grid = (B // bs, pl.cdiv(rows, tr))                         # ragged tail masked by Pallas

    block = (bs, tr, _LANE)
    out_shape = jax.ShapeDtypeStruct((B, rows, _LANE), x.dtype)
    cparams = pltpu.CompilerParams(dimension_semantics=("parallel", "parallel"))

    if on_tpu:
        seed_arr = jnp.array([seed, device_index], dtype=jnp.int32)
        out3 = pl.pallas_call(
            _make_fused_kernel(bs, compute_dtype),
            out_shape=out_shape,
            grid_spec=pltpu.PrefetchScalarGridSpec(
                num_scalar_prefetch=2,                          # seed, sigma -> SMEM
                grid=grid,
                in_specs=[pl.BlockSpec(block, lambda b, r, seed, sig: (b, r, 0))],
                out_specs=pl.BlockSpec(block, lambda b, r, seed, sig: (b, r, 0)),
            ),
            compiler_params=cparams,
            input_output_aliases=({2: 0} if donate_x else {}),  # donate x's HBM buffer
        )(seed_arr, sigma_shard, x3)
    else:
        # Interpreter / non-TPU fallback: TPU stateful PRNG has no CPU lowering,
        # so draw the standard normal with jax.random and fuse only the scale+add.
        key = jax.random.fold_in(jax.random.PRNGKey(seed), device_index)
        noise3 = jax.random.normal(key, x3.shape, dtype=jnp.float32)
        out3 = pl.pallas_call(
            _make_addnoise_kernel(bs),
            out_shape=out_shape,
            grid_spec=pltpu.PrefetchScalarGridSpec(
                num_scalar_prefetch=1,                          # sigma -> SMEM
                grid=grid,
                in_specs=[pl.BlockSpec(block, lambda b, r, sig: (b, r, 0)),
                          pl.BlockSpec(block, lambda b, r, sig: (b, r, 0))],
                out_specs=pl.BlockSpec(block, lambda b, r, sig: (b, r, 0)),
            ),
            compiler_params=cparams,
            input_output_aliases=({1: 0} if donate_x else {}),
        )(sigma_shard, x3, noise3)

    out = out3.reshape(B, rows * _LANE)
    if lane_pad:
        out = out[:, :n_elems]
    return out.reshape(orig_shape)


if __name__ == "__main__":
    B, C, H, W = 2, 4, 16, 16
    sigma_min, sigma_max = 0.0, 0.2

    key = jax.random.PRNGKey(0)
    k_x, k_sigma = jax.random.split(key, 2)

    x = jax.random.normal(k_x, (B, C, H, W), dtype=jnp.float32)

    # __init__ semantics: sigma = rand(B,1,1,1) * (sigma_max - sigma_min) + sigma_min
    sigma = (
        jax.random.uniform(k_sigma, (B, 1, 1, 1), dtype=jnp.float32)
        * (sigma_max - sigma_min)
        + sigma_min
    )

    out = jax.block_until_ready(parallel_gaussian_noise(x, sigma, seed=0))

    assert out.shape == x.shape and out.dtype == x.dtype
    assert bool(jnp.isfinite(out).all())

    # Determinism: same seed -> identical draw.
    out2 = jax.block_until_ready(parallel_gaussian_noise(x, sigma, seed=0))
    assert bool(jnp.array_equal(out, out2))

    # Statistical check: (out - x) should be ~N(0, sigma_b^2) per sample.
    z = (out - x).reshape(B, -1)
    sig = sigma.reshape(B)
    for b in range(B):
        s = float(sig[b])
        mean_b = float(jnp.mean(z[b]))
        std_b = float(jnp.std(z[b]))
        assert abs(mean_b) < 0.25 * s + 1e-2, (b, mean_b, s)
        assert abs(std_b - s) < 0.25 * s + 1e-2, (b, std_b, s)

    print("KERNEL_OK")
</pallas_src>

<mosaic_0001>
module attributes {stable_mosaic.version = 11 : i64} {
  func.func @kernel(%arg0: i32, %arg1: i32, %arg2: memref<2xf32, #tpu.memory_space<smem>>, %arg3: memref<2x8x128xf32, #tpu.memory_space<vmem>>, %arg4: memref<2x8x128xf32, #tpu.memory_space<vmem>>, %arg5: memref<2x8x128xf32, #tpu.memory_space<vmem>>) attributes {dimension_semantics = [#tpu.dimension_semantics<parallel>, #tpu.dimension_semantics<parallel>], iteration_bounds = array<i64: 1, 1>, scalar_prefetch = 1 : i64, scratch_operands = 0 : i64, tpu.core_type = #tpu.core_type<tc>, window_params = [{transform_indices = @transform_0, window_bounds = array<i64: 2, 8, 128>}, {transform_indices = @transform_1, window_bounds = array<i64: 2, 8, 128>}, {transform_indices = @transform_2, window_bounds = array<i64: 2, 8, 128>}]} {
    %c2_i32 = arith.constant 2 : i32
    %0 = arith.muli %arg0, %c2_i32 : i32
    %c0_i32 = arith.constant 0 : i32
    %1 = arith.addi %0, %c0_i32 : i32
    %2 = arith.index_cast %1 : i32 to index
    %3 = memref.load %arg2[%2] : memref<2xf32, #tpu.memory_space<smem>>
    %c0 = arith.constant 0 : index
    %c0_0 = arith.constant 0 : index
    %c0_1 = arith.constant 0 : index
    %4 = vector.load %arg3[%c0, %c0_0, %c0_1] : memref<2x8x128xf32, #tpu.memory_space<vmem>>, vector<1x8x128xf32>
    %5 = vector.shape_cast %4 : vector<1x8x128xf32> to vector<8x128xf32>
    %c0_2 = arith.constant 0 : index
    %c0_3 = arith.constant 0 : index
    %c0_4 = arith.constant 0 : index
    %6 = vector.load %arg4[%c0_2, %c0_3, %c0_4] : memref<2x8x128xf32, #tpu.memory_space<vmem>>, vector<1x8x128xf32>
    %7 = vector.shape_cast %6 : vector<1x8x128xf32> to vector<8x128xf32>
    %8 = vector.broadcast %3 : f32 to vector<8x128xf32>
    %9 = arith.mulf %7, %8 : vector<8x128xf32>
    %10 = arith.addf %5, %9 : vector<8x128xf32>
    %c0_5 = arith.constant 0 : index
    %c0_6 = arith.constant 0 : index
    %c0_7 = arith.constant 0 : index
    %11 = vector.load %arg5[%c0_5, %c0_6, %c0_7] : memref<2x8x128xf32, #tpu.memory_space<vmem>>, vector<1x8x128xf32>
    %12 = vector.shape_cast %11 : vector<1x8x128xf32> to vector<8x128xf32>
    %13 = vector.shape_cast %10 : vector<8x128xf32> to vector<1x8x128xf32>
    tpu.vector_store %arg5[%c0_5, %c0_6, %c0_7], %13 {strides = array<i32>} : memref<2x8x128xf32, #tpu.memory_space<vmem>>, vector<1x8x128xf32>,
    %c2_i32_8 = arith.constant 2 : i32
    %14 = arith.muli %arg0, %c2_i32_8 : i32
    %c1_i32 = arith.constant 1 : i32
    %15 = arith.addi %14, %c1_i32 : i32
    %16 = arith.index_cast %15 : i32 to index
    %17 = memref.load %arg2[%16] : memref<2xf32, #tpu.memory_space<smem>>
    %c1 = arith.constant 1 : index
    %c0_9 = arith.constant 0 : index
    %c0_10 = arith.constant 0 : index
    %18 = vector.load %arg3[%c1, %c0_9, %c0_10] : memref<2x8x128xf32, #tpu.memory_space<vmem>>, vector<1x8x128xf32>
    %19 = vector.shape_cast %18 : vector<1x8x128xf32> to vector<8x128xf32>
    %c1_11 = arith.constant 1 : index
    %c0_12 = arith.constant 0 : index
    %c0_13 = arith.constant 0 : index
    %20 = vector.load %arg4[%c1_11, %c0_12, %c0_13] : memref<2x8x128xf32, #tpu.memory_space<vmem>>, vector<1x8x128xf32>
    %21 = vector.shape_cast %20 : vector<1x8x128xf32> to vector<8x128xf32>
    %22 = vector.broadcast %17 : f32 to vector<8x128xf32>
    %23 = arith.mulf %21, %22 : vector<8x128xf32>
    %24 = arith.addf %19, %23 : vector<8x128xf32>
    %c1_14 = arith.constant 1 : index
    %c0_15 = arith.constant 0 : index
    %c0_16 = arith.constant 0 : index
    %25 = vector.load %arg5[%c1_14, %c0_15, %c0_16] : memref<2x8x128xf32, #tpu.memory_space<vmem>>, vector<1x8x128xf32>
    %26 = vector.shape_cast %25 : vector<1x8x128xf32> to vector<8x128xf32>
    %27 = vector.shape_cast %24 : vector<8x128xf32> to vector<1x8x128xf32>
    tpu.vector_store %arg5[%c1_14, %c0_15, %c0_16], %27 {strides = array<i32>} : memref<2x8x128xf32, #tpu.memory_space<vmem>>, vector<1x8x128xf32>,
    return
  }
  func.func @transform_0(%arg0: i32, %arg1: i32, %arg2: memref<2xf32, #tpu.memory_space<smem>>) -> (i32, i32, i32) {
    %c0_i32 = arith.constant 0 : i32
    %c0_i32_0 = arith.constant 0 : i32
    return %arg0, %arg1, %c0_i32 : i32, i32, i32
  }
  func.func @transform_1(%arg0: i32, %arg1: i32, %arg2: memref<2xf32, #tpu.memory_space<smem>>) -> (i32, i32, i32) {
    %c0_i32 = arith.constant 0 : i32
    %c0_i32_0 = arith.constant 0 : i32
    return %arg0, %arg1, %c0_i32 : i32, i32, i32
  }
  func.func @transform_2(%arg0: i32, %arg1: i32, %arg2: memref<2xf32, #tpu.memory_space<smem>>) -> (i32, i32, i32) {
    %c0_i32 = arith.constant 0 : i32
    %c0_i32_0 = arith.constant 0 : i32
    return %arg0, %arg1, %c0_i32 : i32, i32, i32
  }
}

</mosaic_0001>

<llo_original>
// kernel: tpu_custom_call.1
$region0: #{tpu_custom_call.1}
  #allocation0 [shape = 'u32[]', space=smem, size = 0x4, offset = 0x4, fixed_abs, tag = 'smem constant byte address 0x4 - core index']
  #allocation1 [shape = 'u32[144,128]{1,0:T(1,128)}', space=vmem, size = 0x12000, scoped, tag = 'internal scratch']
  #allocation2 [shape = 's32[1]{0}', space=sflag, size = 0x4, scoped, tag = 'scoped memory for tpu_custom_call.1']
  #allocation3 [shape = 'u8[512]{0}', space=smem, size = 0x200, scoped, tag = 'prefetched SMEM operand 0']
  %s0 = inlined_call_operand.hbm [shape: f32[2], index: 0, kind: input, shape index: {}]
  %s1 = inlined_call_operand.hbm [shape: f32[2,8,128], index: 1, kind: input, shape index: {}]
  %s2 = inlined_call_operand.hbm [shape: f32[2,8,128], index: 2, kind: input, shape index: {}]
  %s3 = inlined_call_operand.hbm [shape: f32[2,8,128], index: 3, kind: output, shape index: {}]
  %s4 = sld [smem:[#allocation0]]
  $region26: #{tpu_custom_call.1} parent=0
    _
  %s6 = ssub.s32 1, %s4
  %s7 = scalar_select 0, %s6, %s4
  %9 = dma.hbm_to_smem %s0, 16, [#allocation3], [#allocation2]
  %10 = dma.done [#allocation2], 16
  %11 = sfence
  $region1: #{tpu_custom_call.1} parent=0
    #allocation4 [shape = 'u8[8192]{0}', space=vmem, size = 0x2000, scoped, tag = 'input window, operand 1, single buffered']
    #allocation5 [shape = 's32[1]{0}', space=sflag, size = 0x4, scoped, tag = 'scoped memory for tpu_custom_call.1']
    #allocation6 [shape = 's32[1]{0}', space=sflag, size = 0x4, scoped, tag = 'scoped memory for tpu_custom_call.1']
    #allocation7 [shape = 'u8[8192]{0}', space=vmem, size = 0x2000, scoped, tag = 'input window, operand 2, single buffered']
    #allocation8 [shape = 's32[1]{0}', space=sflag, size = 0x4, scoped, tag = 'scoped memory for tpu_custom_call.1']
    #allocation9 [shape = 'u8[8192]{0}', space=vmem, size = 0x2000, scoped, tag = 'output window, operand 0, single buffered']
    %12 = vsyncpa [#allocation5], 0
    %13 = vsyncpa [#allocation8], 0
    %14 = vsyncpa [#allocation6], 0
    // Predicated region
    $region2: #{tpu_custom_call.1} parent=1 // pred_check
      _
    $region3: #{tpu_custom_call.1} parent=1 // pred_check_branch
      %16 = sbr.rel (0) target = $region5
    $region4: #{tpu_custom_call.1} parent=1 // pred_region
      %s18 = ssub.s32 256, 256
      %19 = vsyncadd [#allocation5], %s18
      %s20 = sshll.u32 [#allocation4], 4
      %s21 = int_to_ptr.vmem [resolvable:$true] %s20
      %26 = dma.hbm_to_vmem [thread:$0]  %s1, 256, %s21, [#allocation5], 128, 128, 8
    $region5: #{tpu_custom_call.1} parent=1 // pred_fallthru
      _
    // Predicated region
    $region6: #{tpu_custom_call.1} parent=1 // pred_check
      _
    $region7: #{tpu_custom_call.1} parent=1 // pred_check_branch
      %28 = sbr.rel (0) target = $region9
    $region8: #{tpu_custom_call.1} parent=1 // pred_region
      %s30 = ssub.s32 256, 256
      %31 = vsyncadd [#allocation8], %s30
      %s32 = sshll.u32 [#allocation7], 4
      %s33 = int_to_ptr.vmem [resolvable:$true] %s32
      %38 = dma.hbm_to_vmem [thread:$0]  %s2, 256, %s33, [#allocation8], 128, 128, 8
    $region9: #{tpu_custom_call.1} parent=1 // pred_fallthru
      _
    // Predicated region
    $region10: #{tpu_custom_call.1} parent=1 // pred_check
      _
    $region11: #{tpu_custom_call.1} parent=1 // pred_check_branch
      %40 = sbr.rel (0) target = $region13
    $region12: #{tpu_custom_call.1} parent=1 // pred_region
      %41 = dma.done [#allocation5], 256
    $region13: #{tpu_custom_call.1} parent=1 // pred_fallthru
      _
    // Predicated region
    $region14: #{tpu_custom_call.1} parent=1 // pred_check
      _
    $region15: #{tpu_custom_call.1} parent=1 // pred_check_branch
      %43 = sbr.rel (0) target = $region17
    $region16: #{tpu_custom_call.1} parent=1 // pred_region
      %44 = dma.done [#allocation8], 256
    $region17: #{tpu_custom_call.1} parent=1 // pred_fallthru
      _
    %s45 = smul.u32 0, 2
    %s46 = sld [smem:[#allocation3 + %s45]]
    %v47 = vld [vmem:[#allocation4] sm:$0xff]
    %v48 = vld [vmem:[#allocation7] sm:$0xff]
    %v49 = vstv %s46
    %v50 = vmul.f32 %v48, %v49
    %v51 = vadd.f32 %v47, %v50
    %52 = vst [vmem:[#allocation9] sm:$0xff] %v51
    %s53 = sadd.s32 %s45, 1
    %s54 = sld [smem:[#allocation3 + %s53]]
    %s55 = scalar_lea.vmem [#allocation4], 8
    %v56 = vld [vmem:[%s55] sm:$0xff]
    %s57 = scalar_lea.vmem [#allocation7], 8
    %v58 = vld [vmem:[%s57] sm:$0xff]
    %v59 = vstv %s54
    %v60 = vmul.f32 %v58, %v59
    %v61 = vadd.f32 %v56, %v60
    %s62 = scalar_lea.vmem [#allocation9], 8
    %63 = vst [vmem:[%s62] sm:$0xff] %v61
    // Predicated region
    $region18: #{tpu_custom_call.1} parent=1 // pred_check
      _
    $region19: #{tpu_custom_call.1} parent=1 // pred_check_branch
      %65 = sbr.rel (0) target = $region21
    $region20: #{tpu_custom_call.1} parent=1 // pred_region
      %s67 = ssub.s32 256, 256
      %68 = vsyncadd [#allocation6], %s67
      %s69 = sshll.u32 [#allocation9], 4
      %s70 = int_to_ptr.vmem [resolvable:$true] %s69
      %75 = dma.vmem_to_hbm [thread:$0]  %s70, 256, %s3, [#allocation6], 128, 128, 8
    $region21: #{tpu_custom_call.1} parent=1 // pred_fallthru
      _
    // Predicated region
    $region22: #{tpu_custom_call.1} parent=1 // pred_check
      _
    $region23: #{tpu_custom_call.1} parent=1 // pred_check_branch
      %77 = sbr.rel (0) target = $region25
    $region24: #{tpu_custom_call.1} parent=1 // pred_region
      %78 = dma.done [#allocation6], 256
    $region25: #{tpu_custom_call.1} parent=1 // pred_fallthru
      _
    %79 = vsyncpa [#allocation5], 1
    %80 = vsyncpa [#allocation8], 1
    %81 = vsyncpa [#allocation6], 1

</llo_original>
